<compile_context>
chip_gen: v7x
topology: tpu7x:2x2x1
jax: 0.10.0
libtpu: 0.0.40
codegen_flags: <defaults>
</compile_context>

<pallas_src>
import jax
import jax.numpy as jnp
from jax.experimental import pallas as pl
from jax.experimental.pallas import tpu as pltpu


_MAX_INFLIGHT = 4            # number of concurrent HBM->HBM DMAs
_MIN_CHUNK_BYTES = 1 << 20   # don't split below ~1 MiB per chunk


def _chunk_boundaries(rows, total_bytes):
    """Static (start, size) slices of the leading axis, <= _MAX_INFLIGHT chunks."""
    if rows <= 1 or total_bytes < 2 * _MIN_CHUNK_BYTES:
        return [(0, rows)]
    n = min(_MAX_INFLIGHT, rows, max(1, total_bytes // _MIN_CHUNK_BYTES))
    base, rem = divmod(rows, n)
    bounds, start = [], 0
    for i in range(n):
        size = base + (1 if i < rem else 0)
        bounds.append((start, size))
        start += size
    return bounds


def _pallas_identity(x):
    """HBM->HBM DMA identity copy: no VMEM staging, no vector loads/stores."""
    orig_shape, dtype = x.shape, x.dtype
    squeeze_back = False
    if x.ndim == 0:
        x = x.reshape(1)           # DMA slicing needs at least one axis
        squeeze_back = True

    itemsize = jnp.dtype(dtype).itemsize
    n_elems = 1
    for d in x.shape:
        n_elems *= d
    total_bytes = n_elems * itemsize

    bounds = _chunk_boundaries(x.shape[0], total_bytes)
    n_chunks = len(bounds)

    def kernel(x_hbm, o_hbm, sem):
        # Issue all chunk copies (kept in flight), then wait on all of them.
        copies = []
        for i, (start, size) in enumerate(bounds):   # static Python loop
            cp = pltpu.make_async_copy(
                x_hbm.at[pl.ds(start, size)],
                o_hbm.at[pl.ds(start, size)],
                sem.at[i],
            )
            cp.start()
            copies.append(cp)
        for cp in copies:
            cp.wait()

    y = pl.pallas_call(
        kernel,
        out_shape=jax.ShapeDtypeStruct(x.shape, dtype),
        in_specs=[pl.BlockSpec(memory_space=pl.ANY)],
        out_specs=pl.BlockSpec(memory_space=pl.ANY),
        scratch_shapes=[pltpu.SemaphoreType.DMA((n_chunks,))],
        cost_estimate=pl.CostEstimate(
            flops=0, transcendentals=0, bytes_accessed=2 * total_bytes),
    )(x)

    if squeeze_back:
        y = y.reshape(orig_shape)
    return y


class FurryModule:
    """JAX/Pallas port of the furry Module base class (identity logits)."""

    def __init__(self, input_rank=None, dtype=jnp.float32, name=None):
        self._input_rank = input_rank
        self._dtype = dtype        # stored only; forward never casts (matches PyTorch spec)
        self._name = name
        self._init_done_flag = False
        # TODO(synk): module_register / device placement / state_dict save-load
        # are framework glue with no Pallas equivalent; omitted.

    @property
    def input_rank(self):
        return self._input_rank

    @input_rank.setter
    def input_rank(self, input_rank):
        self._input_rank = input_rank

    @property
    def dtype(self):
        return self._dtype

    def init(self, input_size):
        # Base Module has no parameters; nothing to initialize.
        pass

    def _broadcast(self, x):
        # furry.data.prepend_dimension: add a leading batch dim of size 1.
        if self._input_rank is not None and x.ndim == self._input_rank:
            x = x[None, ...]
        return x

    def _logits(self, x):
        # Identity routed through the HBM->HBM DMA copy kernel.
        return _pallas_identity(x)

    def logits(self, x):
        x = self._broadcast(x)
        if not self._init_done_flag:
            self.init(x.shape[1:])
            self._init_done_flag = True
        return self._logits(x)

    def forward(self, x):
        x = jnp.asarray(x)  # preserve input dtype — no forced f32 up-cast
        return self.logits(x)

    def __call__(self, x):
        return self.forward(x)


if __name__ == "__main__":
    key = jax.random.PRNGKey(0)
    k1, k2, k3 = jax.random.split(key, 3)

    module = FurryModule(input_rank=3)

    # Case 1: (C, H, W) with input_rank=3 -> batch dim prepended. Single DMA.
    x1 = jax.random.normal(k1, (4, 16, 16), dtype=jnp.float32)
    y1 = jax.block_until_ready(module(x1))
    assert y1.shape == (1, 4, 16, 16), y1.shape
    assert y1.dtype == jnp.float32
    assert bool(jnp.array_equal(y1[0], x1)), "identity forward mismatch (case 1)"

    # Case 2: already batched (N, C, H, W) -> passes through unchanged.
    x2 = jax.random.normal(k2, (2, 4, 16, 16), dtype=jnp.float32)
    y2 = jax.block_until_ready(module(x2))
    assert y2.shape == (2, 4, 16, 16), y2.shape
    assert bool(jnp.array_equal(y2, x2)), "identity forward mismatch (case 2)"

    # Case 3: bf16 input large enough (~4 MiB) to exercise the multi-chunk
    # in-flight DMA path; dtype and layout are preserved.
    x3 = jax.random.normal(k3, (16, 8, 128, 128), dtype=jnp.bfloat16)
    y3 = jax.block_until_ready(module(x3))
    assert y3.shape == x3.shape, y3.shape
    assert y3.dtype == jnp.bfloat16
    assert bool(jnp.array_equal(y3, x3)), "identity forward mismatch (case 3)"

    print("KERNEL_OK")
</pallas_src>

<mosaic_0001>
module attributes {stable_mosaic.version = 11 : i64} {
  func.func @kernel(%arg0: memref<1x4x16x16xf32, #tpu.memory_space<any>>, %arg1: memref<1x4x16x16xf32, #tpu.memory_space<any>>, %arg2: memref<1x!tpu.dma_semaphore, #tpu.memory_space<semaphore_mem>>) attributes {dimension_semantics = [], scalar_prefetch = 0 : i64, scratch_operands = 1 : i64, tpu.core_type = #tpu.core_type<tc>} {
    %c0_i32 = arith.constant 0 : i32
    %c0_i32_0 = arith.constant 0 : i32
    %c0_i32_1 = arith.constant 0 : i32
    %c0_i32_2 = arith.constant 0 : i32
    %c0_i32_3 = arith.constant 0 : i32
    %0 = tpu.memref_slice %arg0[%c0_i32_0, %c0_i32_1, %c0_i32_2, %c0_i32_3] : memref<1x4x16x16xf32, #tpu.memory_space<any>> -> memref<1x4x16x16xf32, #tpu.memory_space<any>>
    %c0_i32_4 = arith.constant 0 : i32
    %c0_i32_5 = arith.constant 0 : i32
    %c0_i32_6 = arith.constant 0 : i32
    %c0_i32_7 = arith.constant 0 : i32
    %1 = tpu.memref_slice %arg1[%c0_i32_4, %c0_i32_5, %c0_i32_6, %c0_i32_7] : memref<1x4x16x16xf32, #tpu.memory_space<any>> -> memref<1x4x16x16xf32, #tpu.memory_space<any>>
    %2 = tpu.memref_slice %arg2[%c0_i32] : memref<1x!tpu.dma_semaphore, #tpu.memory_space<semaphore_mem>> -> memref<1x!tpu.dma_semaphore, #tpu.memory_space<semaphore_mem>>
    %3 = tpu.memref_squeeze %2 : memref<1x!tpu.dma_semaphore, #tpu.memory_space<semaphore_mem>> -> memref<!tpu.dma_semaphore, #tpu.memory_space<semaphore_mem>>
    tpu.enqueue_dma source(%0 : memref<1x4x16x16xf32, #tpu.memory_space<any>>) target(%1 : memref<1x4x16x16xf32, #tpu.memory_space<any>>) target_semaphore(%3 : memref<!tpu.dma_semaphore, #tpu.memory_space<semaphore_mem>>)
    %c0_i32_8 = arith.constant 0 : i32
    %c0_i32_9 = arith.constant 0 : i32
    %c0_i32_10 = arith.constant 0 : i32
    %c0_i32_11 = arith.constant 0 : i32
    %c0_i32_12 = arith.constant 0 : i32
    %4 = tpu.memref_slice %arg0[%c0_i32_9, %c0_i32_10, %c0_i32_11, %c0_i32_12] : memref<1x4x16x16xf32, #tpu.memory_space<any>> -> memref<1x4x16x16xf32, #tpu.memory_space<any>>
    %c0_i32_13 = arith.constant 0 : i32
    %c0_i32_14 = arith.constant 0 : i32
    %c0_i32_15 = arith.constant 0 : i32
    %c0_i32_16 = arith.constant 0 : i32
    %5 = tpu.memref_slice %arg1[%c0_i32_13, %c0_i32_14, %c0_i32_15, %c0_i32_16] : memref<1x4x16x16xf32, #tpu.memory_space<any>> -> memref<1x4x16x16xf32, #tpu.memory_space<any>>
    %6 = tpu.memref_slice %arg2[%c0_i32_8] : memref<1x!tpu.dma_semaphore, #tpu.memory_space<semaphore_mem>> -> memref<1x!tpu.dma_semaphore, #tpu.memory_space<semaphore_mem>>
    %7 = tpu.memref_squeeze %6 : memref<1x!tpu.dma_semaphore, #tpu.memory_space<semaphore_mem>> -> memref<!tpu.dma_semaphore, #tpu.memory_space<semaphore_mem>>
    tpu.wait_dma2 semaphore(%7 : memref<!tpu.dma_semaphore, #tpu.memory_space<semaphore_mem>>) src(%4 : memref<1x4x16x16xf32, #tpu.memory_space<any>>) dst(%5 : memref<1x4x16x16xf32, #tpu.memory_space<any>>)
    return
  }
}

</mosaic_0001>

<llo_original>
// kernel: tpu_custom_call.1
$region0: #{tpu_custom_call.1}
  #allocation0 [shape = 'u32[]', space=smem, size = 0x4, offset = 0x4, fixed_abs, tag = 'smem constant byte address 0x4 - core index']
  #allocation1 [shape = 'u32[144,128]{1,0:T(1,128)}', space=vmem, size = 0x12000, scoped, tag = 'internal scratch']
  #allocation2 [shape = 's32[1]{0}', space=sflag, size = 0x4, scoped, tag = 'scratch operand']
  #allocation3 [shape = 's32[]', space=sflag, size = 0x4, offset = 0, fixed_abs, tag = 'sflag constant byte address 0x0 - dummy sync flag']
  #allocation4 [shape = 'u32[0]{0}', space=smem, size = 0, offset = 0, fixed_abs, tag = 'smem constant byte address 0x0 - null']
  %s0 = inlined_call_operand.hbm [shape: f32[1,4,16,16], index: 0, kind: input, shape index: {}]
  %s1 = inlined_call_operand.hbm [shape: f32[1,4,16,16], index: 1, kind: output, shape index: {}]
  %s2 = sld [smem:[#allocation0]]
  $region2: #{tpu_custom_call.1} parent=0
    _
  %s4 = ssub.s32 1, %s2
  %s5 = scalar_select 0, %s4, %s2
  %s7 = sshll.u32 1, 14
  %s8 = sxor.u32 4294967295, %s7
  %s11 = sshll.u32 3, 24
  %s12 = sxor.u32 4294967295, %s11
  %s13 = sand.u32 0, %s12
  %s15 = sor.u32 %s13, 0
  %18 = dma.general %s0, 1024, %s1, [#allocation2], [#allocation3], [#allocation4], %s15, 0
  %s19 = smul.u32 1, 4
  %s20 = smul.u32 %s19, 16
  %s21 = smul.u32 %s20, 1
  %s22 = sshll.u32 %s21, 4
  %23 = dma.done [#allocation2], %s22
  %24 = vsyncmov [#allocation2]
  %s25 = vpop.sfrf %24
  %p26 = scmp.eq.s32.totalorder %s25, 0
  %p27 = pneg %p26
  %29 = shalt.err (%p27)

</llo_original>
